<compile_context>
chip_gen: v7x
topology: tpu7x:2x2x1
jax: 0.10.0
libtpu: 0.0.40
codegen_flags: <defaults>
</compile_context>

<pallas_src>
import functools
import math

import jax
import jax.numpy as jnp
from jax.experimental import pallas as pl
from jax.experimental.pallas import tpu as pltpu


def _nll_partial_fold_kernel(pred_ref, tgt_ref, expand_ref, lane_ref, out_ref,
                             *, num_rows, needs_mask):
    """Lane-dense path: pred block (TM, W=fold*C); targets (TM, fold) bf16 are
    expanded to (TM, W) with a tiny MXU matmul against the resident one-hot;
    the class test is one f32 compare per vreg."""
    TM, W = pred_ref.shape
    # t_exp[r, l] = target[packed sub-row l // C]   (exact small ints in f32)
    t_exp = jnp.dot(tgt_ref[...], expand_ref[...],
                    preferred_element_type=jnp.float32)          # (TM, W)
    mask = t_exp == lane_ref[...]                                # vs (1, W) = l % C
    if needs_mask:
        base = pl.program_id(0) * TM
        row = jax.lax.broadcasted_iota(jnp.int32, (TM, 1), 0)
        mask = jnp.logical_and(mask, row < (num_rows - base))
    picked = jnp.where(mask, pred_ref[...].astype(jnp.float32), 0.0)
    # Layout-preserving sublane-group reduction (pure VALU adds).
    out_ref[...] = picked.reshape(TM // 8, 8, W).sum(axis=0)


def _nll_partial_plain_kernel(pred_ref, tgt_ref, out_ref, *, num_rows,
                              needs_mask):
    """Fallback path (no fold): pred block (TM, C); targets (TM, 1) int32;
    the class test is one lane-iota compare per vreg."""
    TM, W = pred_ref.shape
    col = jax.lax.broadcasted_iota(jnp.int32, (1, W), 1)
    mask = col == tgt_ref[...]                                   # (TM, W)
    if needs_mask:
        base = pl.program_id(0) * TM
        row = jax.lax.broadcasted_iota(jnp.int32, (TM, 1), 0)
        mask = jnp.logical_and(mask, row < (num_rows - base))
    picked = jnp.where(mask, pred_ref[...].astype(jnp.float32), 0.0)
    out_ref[...] = picked.reshape(TM // 8, 8, W).sum(axis=0)


def _round_up(x, m):
    return -(-x // m) * m


def _chip_params():
    """(tile_bytes, vmem_limit_bytes, force_multi_step) per TPU generation."""
    kind = ""
    try:
        kind = jax.devices()[0].device_kind.lower()
    except Exception:
        pass
    if "v7" in kind or "7x" in kind:
        # 64 MiB physical VMEM, 2 TensorCores: smaller tiles, keep B >= 2.
        return 2 * 1024 * 1024, 48 * 1024 * 1024, True
    if "v6" in kind or "v5" in kind:
        # 128 MiB physical VMEM, 1 TensorCore: big tiles, high explicit limit
        # (v5e's scoped default is only 16 MiB, so the limit is load-bearing).
        return 4 * 1024 * 1024, 64 * 1024 * 1024, False
    return 2 * 1024 * 1024, 32 * 1024 * 1024, False


def nll_loss_pallas(pred, target):
    """pred: (N, C) log-probabilities (f32 or bf16); target: (N,) class ids.
    Returns scalar mean NLL loss, matching F.nll_loss(pred, target)."""
    if pred.dtype.name not in ("float32", "bfloat16"):
        pred = pred.astype(jnp.float32)
    N, C = pred.shape
    tgt = target.astype(jnp.int32).reshape(N)

    tile_bytes, vmem_limit, force_multi_step = _chip_params()

    # Lane-dense fold: W = fold * C is a multiple of 128.
    fold = 128 // math.gcd(C, 128)
    use_fold = fold > 1 and C < 128 and N % fold == 0 and fold * C <= 8192

    if use_fold:
        M, W = N // fold, fold * C
        pred_in = pred.reshape(M, W)                   # free contiguous reshape
        tgt_in = tgt.reshape(M, fold).astype(jnp.bfloat16)   # C < 128 -> exact
        lane = jnp.arange(W, dtype=jnp.int32)
        expand = (lane[None, :] // C ==
                  jnp.arange(fold, dtype=jnp.int32)[:, None]).astype(jnp.bfloat16)
        lane_cls = (lane % C).astype(jnp.float32)[None, :]          # (1, W)
        tgt_row_vmem = 128 * 2           # bf16 (TM, fold) lane-pads to 128 lanes
    else:
        M, W = N, C
        pred_in = pred
        tgt_in = tgt.reshape(M, 1)
        tgt_row_vmem = 128 * 4           # int32 (TM, 1) lane-pads to 128 lanes

    # Row tile: budget includes the lane-padded target buffer; multiple of 16
    # (bf16 sublane packing), capped at the (rounded-up) array extent.
    row_bytes = W * pred_in.dtype.itemsize + tgt_row_vmem
    TM = max(16, (tile_bytes // row_bytes) // 16 * 16)
    TM = min(TM, _round_up(M, 16))
    if force_multi_step and M > 16:
        # Guarantee >= 2 grid steps so the parallel axis splits over both TCs.
        TM = min(TM, _round_up(_round_up(M, 2) // 2, 16))
    B = pl.cdiv(M, TM)
    needs_mask = (M % TM) != 0

    out_shape = jax.ShapeDtypeStruct((B * 8, W), jnp.float32)
    compiler_params = pltpu.CompilerParams(
        dimension_semantics=("parallel",),
        vmem_limit_bytes=vmem_limit,
    )

    if use_fold:
        kernel = functools.partial(_nll_partial_fold_kernel, num_rows=M,
                                   needs_mask=needs_mask)
        partials = pl.pallas_call(
            kernel,
            out_shape=out_shape,
            grid_spec=pltpu.PrefetchScalarGridSpec(
                num_scalar_prefetch=0,
                grid=(B,),
                in_specs=[
                    pl.BlockSpec((TM, W), lambda i: (i, 0)),
                    pl.BlockSpec((TM, fold), lambda i: (i, 0)),
                    # Tiny constants: constant index_map -> fetched once, resident.
                    pl.BlockSpec((fold, W), lambda i: (0, 0)),
                    pl.BlockSpec((1, W), lambda i: (0, 0)),
                ],
                out_specs=pl.BlockSpec((8, W), lambda i: (i, 0)),
            ),
            compiler_params=compiler_params,
        )(pred_in, tgt_in, expand, lane_cls)
    else:
        kernel = functools.partial(_nll_partial_plain_kernel, num_rows=M,
                                   needs_mask=needs_mask)
        partials = pl.pallas_call(
            kernel,
            out_shape=out_shape,
            grid_spec=pltpu.PrefetchScalarGridSpec(
                num_scalar_prefetch=0,
                grid=(B,),
                in_specs=[
                    pl.BlockSpec((TM, W), lambda i: (i, 0)),
                    pl.BlockSpec((TM, 1), lambda i: (i, 0)),
                ],
                out_specs=pl.BlockSpec((8, W), lambda i: (i, 0)),
            ),
            compiler_params=compiler_params,
        )(pred_in, tgt_in)

    # Tiny finalize in plain JAX: cross-lane reduce and scale by -1/N.
    return jnp.sum(partials) * (-1.0 / N)


class GetLoss:
    """JAX/Pallas port of the PyTorch `get_loss` module (no parameters)."""

    def __init__(self):
        self._fn = jax.jit(nll_loss_pallas)

    def __call__(self, pred, target, trans_feat=None):
        # trans_feat is accepted for signature parity but unused, as in PyTorch.
        return self._fn(pred, target)


if __name__ == "__main__":
    key = jax.random.PRNGKey(0)
    k1, k2, k3, k4, k5 = jax.random.split(key, 5)

    loss_fn = GetLoss()
    trans_feat = jax.random.normal(k3, (2, 64, 64), dtype=jnp.float32)  # unused

    # Case 1: C=40 (ModelNet40-style) -> generalized fold path (fold=16, W=640).
    N1, C1 = 256, 40
    pred1 = jax.nn.log_softmax(
        jax.random.normal(k1, (N1, C1), dtype=jnp.float32), axis=-1)
    tgt1 = jax.random.randint(k2, (N1,), 0, C1, dtype=jnp.int32)
    loss1 = jax.block_until_ready(loss_fn(pred1, tgt1, trans_feat))
    ref1 = -jnp.mean(jnp.take_along_axis(pred1, tgt1[:, None], axis=1)[:, 0])
    assert jnp.allclose(loss1, ref1, atol=1e-3, rtol=1e-3), (loss1, ref1)

    # Case 2: N not divisible by fold -> plain path with masked tail block.
    N2, C2 = 200, 40
    pred2 = jax.nn.log_softmax(
        jax.random.normal(k4, (N2, C2), dtype=jnp.float32), axis=-1)
    tgt2 = jax.random.randint(k5, (N2,), 0, C2, dtype=jnp.int32)
    loss2 = jax.block_until_ready(loss_fn(pred2, tgt2, trans_feat))
    ref2 = -jnp.mean(jnp.take_along_axis(pred2, tgt2[:, None], axis=1)[:, 0])
    assert jnp.allclose(loss2, ref2, atol=1e-3, rtol=1e-3), (loss2, ref2)

    # Case 3: bf16 log-probs streamed as bf16 (halved HBM traffic).
    pred3 = pred1.astype(jnp.bfloat16)
    loss3 = jax.block_until_ready(loss_fn(pred3, tgt1, trans_feat))
    ref3 = -jnp.mean(jnp.take_along_axis(
        pred3.astype(jnp.float32), tgt1[:, None], axis=1)[:, 0])
    assert jnp.allclose(loss3, ref3, atol=2e-3, rtol=2e-3), (loss3, ref3)

    print("KERNEL_OK")
</pallas_src>

<mosaic_0001>
module attributes {stable_mosaic.version = 11 : i64} {
  func.func @_nll_partial_fold_kernel(%arg0: i32, %arg1: memref<16x640xf32, #tpu.memory_space<vmem>>, %arg2: memref<16x16xbf16, #tpu.memory_space<vmem>>, %arg3: memref<16x640xbf16, #tpu.memory_space<vmem>>, %arg4: memref<1x640xf32, #tpu.memory_space<vmem>>, %arg5: memref<8x640xf32, #tpu.memory_space<vmem>>) attributes {dimension_semantics = [#tpu.dimension_semantics<parallel>], iteration_bounds = array<i64: 1>, scalar_prefetch = 0 : i64, scratch_operands = 0 : i64, tpu.core_type = #tpu.core_type<tc>, window_params = [{transform_indices = @transform_0, window_bounds = array<i64: 16, 640>}, {transform_indices = @transform_1, window_bounds = array<i64: 16, 16>}, {pipeline_mode = #tpu.pipeline_mode<synchronous>, transform_indices = @transform_2, window_bounds = array<i64: 16, 640>}, {pipeline_mode = #tpu.pipeline_mode<synchronous>, transform_indices = @transform_3, window_bounds = array<i64: 1, 640>}, {transform_indices = @transform_4, window_bounds = array<i64: 8, 640>}]} {
    %c0 = arith.constant 0 : index
    %c0_0 = arith.constant 0 : index
    %0 = vector.load %arg2[%c0, %c0_0] : memref<16x16xbf16, #tpu.memory_space<vmem>>, vector<16x16xbf16>
    %c0_1 = arith.constant 0 : index
    %c0_2 = arith.constant 0 : index
    %1 = vector.load %arg3[%c0_1, %c0_2] : memref<16x640xbf16, #tpu.memory_space<vmem>>, vector<16x640xbf16>
    %cst = arith.constant dense<0.000000e+00> : vector<16x640xf32>
    %2 = tpu.matmul %0, %1, %cst {dimension_numbers = #tpu.dot_dimension_numbers<[1], [0], [0], [1], [0, 0, 1, 1], [], []>} : vector<16x16xbf16>, vector<16x640xbf16>, vector<16x640xf32> -> vector<16x640xf32>
    %c0_3 = arith.constant 0 : index
    %c0_4 = arith.constant 0 : index
    %3 = vector.load %arg4[%c0_3, %c0_4] : memref<1x640xf32, #tpu.memory_space<vmem>>, vector<1x640xf32>
    %4 = vector.broadcast %3 : vector<1x640xf32> to vector<16x640xf32>
    %5 = arith.cmpf oeq, %2, %4 : vector<16x640xf32>
    %c0_5 = arith.constant 0 : index
    %c0_6 = arith.constant 0 : index
    %6 = vector.load %arg1[%c0_5, %c0_6] : memref<16x640xf32, #tpu.memory_space<vmem>>, vector<16x640xf32>
    %cst_7 = arith.constant 0.000000e+00 : f32
    %7 = vector.broadcast %cst_7 : f32 to vector<16x640xf32>
    %8 = arith.select %5, %6, %7 : vector<16x640xi1>, vector<16x640xf32>
    %9 = vector.shape_cast %8 : vector<16x640xf32> to vector<2x8x640xf32>
    %cst_8 = arith.constant dense<0.000000e+00> : vector<8x640xf32>
    %10 = vector.multi_reduction <add>, %9, %cst_8 [0] : vector<2x8x640xf32> to vector<8x640xf32>
    %c0_9 = arith.constant 0 : index
    %c0_10 = arith.constant 0 : index
    %11 = vector.load %arg5[%c0_9, %c0_10] : memref<8x640xf32, #tpu.memory_space<vmem>>, vector<8x640xf32>
    tpu.vector_store %arg5[%c0_9, %c0_10], %10 {strides = array<i32>} : memref<8x640xf32, #tpu.memory_space<vmem>>, vector<8x640xf32>,
    return
  }
  func.func @transform_0(%arg0: i32) -> (i32, i32) {
    %c0_i32 = arith.constant 0 : i32
    %c0_i32_0 = arith.constant 0 : i32
    return %arg0, %c0_i32 : i32, i32
  }
  func.func @transform_1(%arg0: i32) -> (i32, i32) {
    %c0_i32 = arith.constant 0 : i32
    %c0_i32_0 = arith.constant 0 : i32
    return %arg0, %c0_i32 : i32, i32
  }
  func.func @transform_2(%arg0: i32) -> (i32, i32) {
    %c0_i32 = arith.constant 0 : i32
    %c0_i32_0 = arith.constant 0 : i32
    %c0_i32_1 = arith.constant 0 : i32
    return %c0_i32, %c0_i32_0 : i32, i32
  }
  func.func @transform_3(%arg0: i32) -> (i32, i32) {
    %c0_i32 = arith.constant 0 : i32
    %c0_i32_0 = arith.constant 0 : i32
    %c0_i32_1 = arith.constant 0 : i32
    return %c0_i32, %c0_i32_0 : i32, i32
  }
  func.func @transform_4(%arg0: i32) -> (i32, i32) {
    %c0_i32 = arith.constant 0 : i32
    %c0_i32_0 = arith.constant 0 : i32
    return %arg0, %c0_i32 : i32, i32
  }
}

</mosaic_0001>

<llo_original>
// kernel: nll_loss_pallas.1
$region0: #{nll_loss_pallas.1}
  #allocation0 [shape = 'u32[]', space=smem, size = 0x4, offset = 0x4, fixed_abs, tag = 'smem constant byte address 0x4 - core index']
  #allocation1 [shape = 'u32[144,128]{1,0:T(1,128)}', space=vmem, size = 0x12000, scoped, tag = 'internal scratch']
  %s0 = inlined_call_operand.vmem [shape: f32[16,640], index: 0, kind: input, shape index: {}]
  %s1 = inlined_call_operand.vmem [shape: bf16[16,16], index: 1, kind: input, shape index: {}]
  %s2 = inlined_call_operand.vmem [shape: bf16[16,640], index: 2, kind: input, shape index: {}]
  %s3 = inlined_call_operand.vmem [shape: f32[1,640], index: 3, kind: input, shape index: {}]
  %s4 = inlined_call_operand.vmem [shape: f32[8,640], index: 4, kind: output, shape index: {}]
  %s5 = sld [smem:[#allocation0]]
  $region26: #{nll_loss_pallas.1} parent=0
    _
  %s7 = ssub.s32 1, %s5
  %s8 = scalar_select 0, %s7, %s5
  // Predicated region
  $region2: #{nll_loss_pallas.1} parent=0 // pred_check
    _
  $region3: #{nll_loss_pallas.1} parent=0 // pred_check_branch
    %10 = sbr.rel (0) target = $region5
  $region4: #{nll_loss_pallas.1} parent=0 // pred_region
    _
  $region5: #{nll_loss_pallas.1} parent=0 // pred_fallthru
    _
  // Predicated region
  $region6: #{nll_loss_pallas.1} parent=0 // pred_check
    _
  $region7: #{nll_loss_pallas.1} parent=0 // pred_check_branch
    %12 = sbr.rel (0) target = $region9
  $region8: #{nll_loss_pallas.1} parent=0 // pred_region
    _
  $region9: #{nll_loss_pallas.1} parent=0 // pred_fallthru
    _
  // Predicated region
  $region10: #{nll_loss_pallas.1} parent=0 // pred_check
    _
  $region11: #{nll_loss_pallas.1} parent=0 // pred_check_branch
    %14 = sbr.rel (0) target = $region13
  $region12: #{nll_loss_pallas.1} parent=0 // pred_region
    _
  $region13: #{nll_loss_pallas.1} parent=0 // pred_fallthru
    _
  // Predicated region
  $region14: #{nll_loss_pallas.1} parent=0 // pred_check
    _
  $region15: #{nll_loss_pallas.1} parent=0 // pred_check_branch
    %16 = sbr.rel (0) target = $region17
  $region16: #{nll_loss_pallas.1} parent=0 // pred_region
    _
  $region17: #{nll_loss_pallas.1} parent=0 // pred_fallthru
    _
  %v18 = vld [vmem:[%s1] sm:$0xf]
  %v19 = vld [vmem:[%s1 + $0x4] sm:$0xf]
  %v20 = vld [vmem:[%s2] sm:$0xff]
  %v21 = vld [vmem:[%s2 + $0x8] sm:$0xff]
  %v22 = vld [vmem:[%s2 + $0x10] sm:$0xf]
  %v23 = vld [vmem:[%s2 + $0x14] sm:$0xff]
  %v24 = vld [vmem:[%s2 + $0x1c] sm:$0xff]
  %v25 = vld [vmem:[%s2 + $0x24] sm:$0xf]
  %v28 = vunpack.c.l.b16 %v18
  %v29 = vunpack.c.l.b16 %v19
  %v30 = vpack.c.b16 %v29, %v28
  %v37 = vunpack.c.l.b16 %v20
  %v38 = vunpack.c.h.b16 %v20
  %v39 = vunpack.c.l.b16 %v21
  %v40 = vunpack.c.h.b16 %v21
  %v41 = vunpack.c.l.b16 %v22
  %v42 = vunpack.c.l.b16 %v23
  %v43 = vunpack.c.h.b16 %v23
  %v44 = vunpack.c.l.b16 %v24
  %v45 = vunpack.c.h.b16 %v24
  %v46 = vunpack.c.l.b16 %v25
  %v47 = vpack.c.b16 %v42, %v37
  %v48 = vpack.c.b16 %v43, %v38
  %v49 = vpack.c.b16 %v44, %v39
  %v50 = vpack.c.b16 %v45, %v40
  %v51 = vpack.c.b16 %v46, %v41
  %vm57 = vcmask 130048
  %v59 = vsel %vm57, %v30, 0
  %61 = vmatprep.subr.bf16.mxu0 %v48
  %62 = vmatpush1.bf16.msra.mxu0 %v47
  %63 = vmatprep.subr.bf16.mxu0 0
  %64 = vmatpush1.bf16.msra.mxu0 0
  %65 = vmatprep.subr.bf16.mxu0 0
  %66 = vmatpush1.bf16.msra.mxu0 0
  %67 = vmatprep.subr.bf16.mxu0 0
  %68 = vmatpush1.bf16.msra.mxu0 0
  %69 = vmatprep.subr.bf16.mxu0 0
  %70 = vmatpush1.bf16.msra.mxu0 0
  %71 = vmatprep.subr.bf16.mxu0 0
  %72 = vmatpush1.bf16.msra.mxu0 0
  %73 = vmatprep.subr.bf16.mxu0 0
  %74 = vmatpush1.bf16.msra.mxu0 0
  %75 = vmatprep.subr.bf16.mxu0 0
  %76 = vmatpush1.bf16.msra.mxu0 0
  %77 = vmatprep.subr.bf16.mxu0 0
  %78 = vmatpush1.bf16.msra.mxu0 0
  %79 = vmatprep.subr.bf16.mxu0 0
  %80 = vmatpush1.bf16.msra.mxu0 0
  %81 = vmatprep.subr.bf16.mxu0 0
  %82 = vmatpush1.bf16.msra.mxu0 0
  %83 = vmatprep.subr.bf16.mxu0 0
  %84 = vmatpush1.bf16.msra.mxu0 0
  %85 = vmatprep.subr.bf16.mxu0 0
  %86 = vmatpush1.bf16.msra.mxu0 0
  %87 = vmatprep.subr.bf16.mxu0 0
  %88 = vmatpush1.bf16.msra.mxu0 0
  %89 = vmatprep.subr.bf16.mxu0 0
  %90 = vmatpush1.bf16.msra.mxu0 0
  %91 = vmatprep.subr.bf16.mxu0 0
  %92 = vmatpush1.bf16.msra.mxu0 0
  %93 = vmatprep.mubr.bf16.mxu0 0
  %94 = vmatmul.mubr.bf16.gmra.mrb[0].mxu0 %v59
  %v95 = vpop.f32.mrb[0].mxu0
  %v96 = vadd.f32 0.0, %v95
  %v97 = vpop.f32.mrb[0].mxu0
  %v98 = vadd.f32 0.0, %v97
  %v99 = vpop.f32.mrb[0].mxu0
  %v100 = vadd.f32 0.0, %v99
  %v101 = vpop.f32.mrb[0].mxu0
  %v102 = vadd.f32 0.0, %v101
  %103 = vdwg.mxu0
  %104 = vmatprep.subr.bf16.mxu0 %v50
  %105 = vmatpush1.bf16.msra.mxu0 %v49
  %106 = vmatprep.subr.bf16.mxu0 0
  %107 = vmatpush1.bf16.msra.mxu0 0
  %108 = vmatprep.subr.bf16.mxu0 0
  %109 = vmatpush1.bf16.msra.mxu0 0
  %110 = vmatprep.subr.bf16.mxu0 0
  %111 = vmatpush1.bf16.msra.mxu0 0
  %112 = vmatprep.subr.bf16.mxu0 0
  %113 = vmatpush1.bf16.msra.mxu0 0
  %114 = vmatprep.subr.bf16.mxu0 0
  %115 = vmatpush1.bf16.msra.mxu0 0
  %116 = vmatprep.subr.bf16.mxu0 0
  %117 = vmatpush1.bf16.msra.mxu0 0
  %118 = vmatprep.subr.bf16.mxu0 0
  %119 = vmatpush1.bf16.msra.mxu0 0
  %120 = vmatprep.subr.bf16.mxu0 0
  %121 = vmatpush1.bf16.msra.mxu0 0
  %122 = vmatprep.subr.bf16.mxu0 0
  %123 = vmatpush1.bf16.msra.mxu0 0
  %124 = vmatprep.subr.bf16.mxu0 0
  %125 = vmatpush1.bf16.msra.mxu0 0
  %126 = vmatprep.subr.bf16.mxu0 0
  %127 = vmatpush1.bf16.msra.mxu0 0
  %128 = vmatprep.subr.bf16.mxu0 0
  %129 = vmatpush1.bf16.msra.mxu0 0
  %130 = vmatprep.subr.bf16.mxu0 0
  %131 = vmatpush1.bf16.msra.mxu0 0
  %132 = vmatprep.subr.bf16.mxu0 0
  %133 = vmatpush1.bf16.msra.mxu0 0
  %134 = vmatprep.subr.bf16.mxu0 0
  %135 = vmatpush1.bf16.msra.mxu0 0
  %136 = vmatprep.mubr.bf16.mxu0 0
  %137 = vmatmul.mubr.bf16.gmra.mrb[0].mxu0 %v59
  %v138 = vpop.f32.mrb[0].mxu0
  %v139 = vadd.f32 0.0, %v138
  %v140 = vpop.f32.mrb[0].mxu0
  %v141 = vadd.f32 0.0, %v140
  %v142 = vpop.f32.mrb[0].mxu0
  %v143 = vadd.f32 0.0, %v142
  %v144 = vpop.f32.mrb[0].mxu0
  %v145 = vadd.f32 0.0, %v144
  %146 = vdwg.mxu0
  %147 = vmatprep.subr.bf16.mxu0 0
  %148 = vmatpush1.bf16.msra.mxu0 %v51
  %149 = vmatprep.subr.bf16.mxu0 0
  %150 = vmatpush1.bf16.msra.mxu0 0
  %151 = vmatprep.subr.bf16.mxu0 0
  %152 = vmatpush1.bf16.msra.mxu0 0
  %153 = vmatprep.subr.bf16.mxu0 0
  %154 = vmatpush1.bf16.msra.mxu0 0
  %155 = vmatprep.subr.bf16.mxu0 0
  %156 = vmatpush1.bf16.msra.mxu0 0
  %157 = vmatprep.subr.bf16.mxu0 0
  %158 = vmatpush1.bf16.msra.mxu0 0
  %159 = vmatprep.subr.bf16.mxu0 0
  %160 = vmatpush1.bf16.msra.mxu0 0
  %161 = vmatprep.subr.bf16.mxu0 0
  %162 = vmatpush1.bf16.msra.mxu0 0
  %163 = vmatprep.subr.bf16.mxu0 0
  %164 = vmatpush1.bf16.msra.mxu0 0
  %165 = vmatprep.subr.bf16.mxu0 0
  %166 = vmatpush1.bf16.msra.mxu0 0
  %167 = vmatprep.subr.bf16.mxu0 0
  %168 = vmatpush1.bf16.msra.mxu0 0
  %169 = vmatprep.subr.bf16.mxu0 0
  %170 = vmatpush1.bf16.msra.mxu0 0
  %171 = vmatprep.subr.bf16.mxu0 0
  %172 = vmatpush1.bf16.msra.mxu0 0
  %173 = vmatprep.subr.bf16.mxu0 0
  %174 = vmatpush1.bf16.msra.mxu0 0
  %175 = vmatprep.subr.bf16.mxu0 0
  %176 = vmatpush1.bf16.msra.mxu0 0
  %177 = vmatprep.subr.bf16.mxu0 0
  %178 = vmatpush1.bf16.msra.mxu0 0
  %179 = vmatprep.mubr.bf16.mxu0 0
  %180 = vmatmul.mubr.bf16.gmra.mrb[0].mxu0 %v59
  %v181 = vpop.f32.mrb[0].mxu0
  %v182 = vadd.f32 0.0, %v181
  %v183 = vpop.f32.mrb[0].mxu0
  %v184 = vpop.f32.mrb[0].mxu0
  %v185 = vadd.f32 0.0, %v184
  %v186 = vpop.f32.mrb[0].mxu0
  %187 = vdwg.mxu0
  %v188 = vld [vmem:[%s3] sm:$0x1f]
  %v190 = vlaneseq
  %v191 = vshrl.u32 %v190, 7
  %v192 = vsub.s32 0, %v191
  %v193 = vrot.slane %v188, %v192
  %v194 = vlaneseq
  %v195 = vshrl.u32 %v194, 7
  %v196 = vsub.s32 1, %v195
  %v197 = vrot.slane %v188, %v196
  %v198 = vlaneseq
  %v199 = vshrl.u32 %v198, 7
  %v200 = vsub.s32 2, %v199
  %v201 = vrot.slane %v188, %v200
  %v202 = vlaneseq
  %v203 = vshrl.u32 %v202, 7
  %v204 = vsub.s32 3, %v203
  %v205 = vrot.slane %v188, %v204
  %v206 = vlaneseq
  %v207 = vshrl.u32 %v206, 7
  %v208 = vsub.s32 4, %v207
  %v209 = vrot.slane %v188, %v208
  %vm215 = vcmp.eq.f32.partialorder %v96, %v193
  %vm216 = vcmp.eq.f32.partialorder %v98, %v197
  %vm217 = vcmp.eq.f32.partialorder %v139, %v201
  %vm218 = vcmp.eq.f32.partialorder %v141, %v205
  %vm219 = vcmp.eq.f32.partialorder %v182, %v209
  %vm220 = vcmp.eq.f32.partialorder %v100, %v193
  %vm221 = vcmp.eq.f32.partialorder %v102, %v197
  %vm222 = vcmp.eq.f32.partialorder %v143, %v201
  %vm223 = vcmp.eq.f32.partialorder %v145, %v205
  %vm224 = vcmp.eq.f32.partialorder %v185, %v209
  %v225 = vld [vmem:[%s0] sm:$0xff]
  %v226 = vld [vmem:[%s0 + $0x8] sm:$0xff]
  %v227 = vld [vmem:[%s0 + $0x10] sm:$0xff]
  %v228 = vld [vmem:[%s0 + $0x18] sm:$0xff]
  %v229 = vld [vmem:[%s0 + $0x20] sm:$0xff]
  %v230 = vld [vmem:[%s0 + $0x28] sm:$0xff]
  %v231 = vld [vmem:[%s0 + $0x30] sm:$0xff]
  %v232 = vld [vmem:[%s0 + $0x38] sm:$0xff]
  %v233 = vld [vmem:[%s0 + $0x40] sm:$0xff]
  %v234 = vld [vmem:[%s0 + $0x48] sm:$0xff]
  %v235 = vsel %vm215, %v225, 0.0
  %v236 = vsel %vm216, %v226, 0.0
  %v237 = vsel %vm217, %v227, 0.0
  %v238 = vsel %vm218, %v228, 0.0
  %v239 = vsel %vm219, %v229, 0.0
  %v240 = vsel %vm220, %v230, 0.0
  %v241 = vsel %vm221, %v231, 0.0
  %v242 = vsel %vm222, %v232, 0.0
  %v243 = vsel %vm223, %v233, 0.0
  %v244 = vsel %vm224, %v234, 0.0
  %v245 = vadd.f32 %v235, %v240
  %v246 = vadd.f32 %v236, %v241
  %v247 = vadd.f32 %v237, %v242
  %v248 = vadd.f32 %v238, %v243
  %v249 = vadd.f32 %v239, %v244
  %250 = vst [vmem:[%s4] sm:$0xff] %v245
  %251 = vst [vmem:[%s4 + $0x8] sm:$0xff] %v246
  %252 = vst [vmem:[%s4 + $0x10] sm:$0xff] %v247
  %253 = vst [vmem:[%s4 + $0x18] sm:$0xff] %v248
  %254 = vst [vmem:[%s4 + $0x20] sm:$0xff] %v249
  // Predicated region
  $region18: #{nll_loss_pallas.1} parent=0 // pred_check
    _
  $region19: #{nll_loss_pallas.1} parent=0 // pred_check_branch
    %256 = sbr.rel (0) target = $region21
  $region20: #{nll_loss_pallas.1} parent=0 // pred_region
    _
  $region21: #{nll_loss_pallas.1} parent=0 // pred_fallthru
    _
  // Predicated region
  $region22: #{nll_loss_pallas.1} parent=0 // pred_check
    _
  $region23: #{nll_loss_pallas.1} parent=0 // pred_check_branch
    %258 = sbr.rel (0) target = $region25
  $region24: #{nll_loss_pallas.1} parent=0 // pred_region
    _
  $region25: #{nll_loss_pallas.1} parent=0 // pred_fallthru
    _

</llo_original>
